<compile_context>
chip_gen: v6e
topology: v6e:2x2x1
jax: 0.10.0
libtpu: 0.0.40
codegen_flags: <defaults>
</compile_context>

<pallas_src>
import jax
import jax.numpy as jnp
from jax.experimental import pallas as pl
from jax.experimental.pallas import tpu as pltpu


_SMALL_BYTES_THRESHOLD = 1 << 20        # below this, use the whole-in-VMEM path
_BCAST_TILE_BUDGET_BYTES = 2 << 20      # cap on the broadcast-prompt VMEM tile


def _cdiv(a, b):
    return -(-a // b)


# ----------------------------------------------------------------------------
# Small-tensor path: everything fits comfortably in VMEM; one pipelined pass.
# ----------------------------------------------------------------------------
def _soft_prompt_small(prompt, x):
    P, D = prompt.shape
    B, S, _ = x.shape

    def kernel(prompt_ref, x_ref, out_ref):
        out_ref[:, 0:P, :] = jnp.broadcast_to(
            prompt_ref[...][None, :, :], (B, P, D)
        )
        out_ref[:, P:P + S, :] = x_ref[...]

    return pl.pallas_call(
        kernel,
        out_shape=jax.ShapeDtypeStruct((B, P + S, D), x.dtype),
        in_specs=[
            pl.BlockSpec(memory_space=pltpu.MemorySpace.VMEM),
            pl.BlockSpec(memory_space=pltpu.MemorySpace.VMEM),
        ],
        out_specs=pl.BlockSpec(memory_space=pltpu.MemorySpace.VMEM),
    )(prompt, x)


# ----------------------------------------------------------------------------
# Large-tensor path: a handful of big strided DMAs, all in flight, one drain.
# ----------------------------------------------------------------------------
def _soft_prompt_dma(prompt, x):
    P, D = prompt.shape
    B, S, _ = x.shape
    dtype = x.dtype
    itemsize = jnp.dtype(dtype).itemsize

    # Two "parallel" grid steps when the batch splits evenly: on v7x each
    # TensorCore issues the DMAs for its half of the batch; on v5e/v6e the
    # second step simply runs back-to-back (negligible cost).
    num_shards = 2 if (B >= 2 and B % 2 == 0) else 1
    B_sh = B // num_shards

    # Broadcast-prompt staging tile: as many batch rows as fit in the budget.
    row_bytes = max(1, P * D * itemsize)
    B_chunk = max(1, min(B_sh, _BCAST_TILE_BUDGET_BYTES // row_bytes))
    n_chunks = _cdiv(B_sh, B_chunk)

    def kernel(prompt_vmem, x_hbm, out_hbm, bcast_vmem, sems):
        b_start = pl.program_id(0) * B_sh

        # (1) One strided HBM->HBM DMA: this shard's whole input slab lands
        #     in rows [P, P+S) of its output slots (dst row stride (P+S)*D).
        x_cp = pltpu.make_async_copy(
            x_hbm.at[pl.ds(b_start, B_sh)],
            out_hbm.at[pl.ds(b_start, B_sh), pl.ds(P, S), :],
            sems.at[0],
        )
        x_cp.start()

        # (2) Materialise the broadcast prompt tile once in VMEM ...
        bcast_vmem[...] = jnp.broadcast_to(
            prompt_vmem[...][None, :, :], (B_chunk, P, D)
        )

        # (3) ... and scatter it into rows [0, P) with a few strided
        #     VMEM->HBM DMAs, all issued before any wait.
        prompt_cps = []
        for c in range(n_chunks):
            bc = min(B_chunk, B_sh - c * B_chunk)
            cp = pltpu.make_async_copy(
                bcast_vmem.at[pl.ds(0, bc)],
                out_hbm.at[pl.ds(b_start + c * B_chunk, bc), pl.ds(0, P), :],
                sems.at[c + 1],
            )
            cp.start()
            prompt_cps.append(cp)

        # (4) Single drain point — everything above was in flight concurrently.
        for cp in prompt_cps:
            cp.wait()
        x_cp.wait()

    # Prompt is read from HBM exactly once now (not B times).
    bytes_accessed = itemsize * (P * D + B * S * D + B * (P + S) * D)
    vmem_need = (3 * P * D + B_chunk * P * D) * itemsize
    vmem_limit = int(min(max(2 * vmem_need + (4 << 20), 16 << 20), 48 << 20))

    return pl.pallas_call(
        kernel,
        out_shape=jax.ShapeDtypeStruct((B, P + S, D), dtype),
        grid_spec=pltpu.PrefetchScalarGridSpec(
            num_scalar_prefetch=0,
            grid=(num_shards,),
            in_specs=[
                pl.BlockSpec((P, D), lambda i: (0, 0)),   # prompt -> VMEM once
                pl.BlockSpec(memory_space=pl.ANY),        # input stays in HBM
            ],
            out_specs=pl.BlockSpec(memory_space=pl.ANY),  # written via DMA
            scratch_shapes=[
                pltpu.VMEM((B_chunk, P, D), dtype),
                pltpu.SemaphoreType.DMA((n_chunks + 1,)),
            ],
        ),
        compiler_params=pltpu.CompilerParams(
            dimension_semantics=("parallel",),
            vmem_limit_bytes=vmem_limit,
        ),
        cost_estimate=pl.CostEstimate(
            flops=0, transcendentals=0, bytes_accessed=int(bytes_accessed)
        ),
    )(prompt, x)


# ----------------------------------------------------------------------------
# Public wrapper (matches SoftPrompt.forward semantics).
# ----------------------------------------------------------------------------
def soft_prompt_forward(prompt_embeddings, input_embeddings):
    """prompt_embeddings: (P, D); input_embeddings: (B, S, D) -> (B, P+S, D)."""
    P, D = prompt_embeddings.shape
    B, S, D2 = input_embeddings.shape
    assert D == D2, "embedding_dim mismatch"
    dtype = input_embeddings.dtype

    # DMA cannot convert dtypes.  Perf note: in a real model, pre-cast the
    # parameter once at parameter-prep time instead of on every forward call.
    if prompt_embeddings.dtype != dtype:
        prompt_embeddings = prompt_embeddings.astype(dtype)

    # Degenerate shapes: no kernel needed (also avoids zero-size DMAs).
    if B == 0 or P + S == 0:
        return jnp.zeros((B, P + S, D), dtype)
    if P == 0:
        return input_embeddings
    if S == 0:
        return jnp.broadcast_to(prompt_embeddings[None, :, :], (B, P, D))

    out_bytes = B * (P + S) * D * jnp.dtype(dtype).itemsize
    if out_bytes < _SMALL_BYTES_THRESHOLD:
        return _soft_prompt_small(prompt_embeddings, input_embeddings)
    return _soft_prompt_dma(prompt_embeddings, input_embeddings)


def soft_prompt_reference(prompt_embeddings, input_embeddings):
    B = input_embeddings.shape[0]
    prompt_b = jnp.broadcast_to(
        prompt_embeddings[None, :, :], (B,) + prompt_embeddings.shape
    ).astype(input_embeddings.dtype)
    return jnp.concatenate([prompt_b, input_embeddings], axis=1)


if __name__ == "__main__":
    # Small shapes consistent with the module: prompt_length=8,
    # embedding_dim=32, batch=2, input seq=8.
    prompt_length = 8
    embedding_dim = 32
    batch = 2
    seq = 8

    key = jax.random.PRNGKey(0)
    k_prompt, k_x = jax.random.split(key)

    # random_init=True -> prompt_embeddings ~ randn(prompt_length, embedding_dim)
    prompt_embeddings = jax.random.normal(
        k_prompt, (prompt_length, embedding_dim), dtype=jnp.float32
    )
    input_embeddings = jax.random.normal(
        k_x, (batch, seq, embedding_dim), dtype=jnp.float32
    )

    ref = soft_prompt_reference(prompt_embeddings, input_embeddings)
    expected_shape = (batch, prompt_length + seq, embedding_dim)

    # Dispatcher path (these shapes take the small whole-in-VMEM kernel).
    out_small = jax.block_until_ready(
        soft_prompt_forward(prompt_embeddings, input_embeddings)
    )
    assert out_small.shape == expected_shape, out_small.shape
    assert jnp.array_equal(out_small, ref), "small-path mismatch vs reference"

    # Also exercise the large-tensor DMA path directly at the same shapes.
    out_dma = jax.block_until_ready(
        _soft_prompt_dma(prompt_embeddings, input_embeddings)
    )
    assert out_dma.shape == expected_shape, out_dma.shape
    assert jnp.array_equal(out_dma, ref), "dma-path mismatch vs reference"

    print("KERNEL_OK")
</pallas_src>

<mosaic_0001>
module attributes {stable_mosaic.version = 11 : i64} {
  func.func @kernel(%arg0: memref<8x32xf32, #tpu.memory_space<vmem>>, %arg1: memref<2x8x32xf32, #tpu.memory_space<vmem>>, %arg2: memref<2x16x32xf32, #tpu.memory_space<vmem>>) attributes {dimension_semantics = [], scalar_prefetch = 0 : i64, scratch_operands = 0 : i64, tpu.core_type = #tpu.core_type<tc>} {
    %c0 = arith.constant 0 : index
    %c0_0 = arith.constant 0 : index
    %0 = vector.load %arg0[%c0, %c0_0] : memref<8x32xf32, #tpu.memory_space<vmem>>, vector<8x32xf32>
    %1 = vector.shape_cast %0 : vector<8x32xf32> to vector<1x8x32xf32>
    %2 = vector.shape_cast %1 : vector<1x8x32xf32> to vector<1x8x32xf32>
    %3 = vector.broadcast %2 : vector<1x8x32xf32> to vector<2x8x32xf32>
    %c0_1 = arith.constant 0 : index
    %c0_2 = arith.constant 0 : index
    %c0_3 = arith.constant 0 : index
    %4 = vector.load %arg2[%c0_1, %c0_2, %c0_3] : memref<2x16x32xf32, #tpu.memory_space<vmem>>, vector<2x8x32xf32>
    tpu.vector_store %arg2[%c0_1, %c0_2, %c0_3], %3 {strides = array<i32>} : memref<2x16x32xf32, #tpu.memory_space<vmem>>, vector<2x8x32xf32>,
    %c0_4 = arith.constant 0 : index
    %c0_5 = arith.constant 0 : index
    %c0_6 = arith.constant 0 : index
    %5 = vector.load %arg1[%c0_4, %c0_5, %c0_6] : memref<2x8x32xf32, #tpu.memory_space<vmem>>, vector<2x8x32xf32>
    %c0_7 = arith.constant 0 : index
    %c8 = arith.constant 8 : index
    %c0_8 = arith.constant 0 : index
    %6 = vector.load %arg2[%c0_7, %c8, %c0_8] : memref<2x16x32xf32, #tpu.memory_space<vmem>>, vector<2x8x32xf32>
    tpu.vector_store %arg2[%c0_7, %c8, %c0_8], %5 {strides = array<i32>} : memref<2x16x32xf32, #tpu.memory_space<vmem>>, vector<2x8x32xf32>,
    return
  }
}

</mosaic_0001>

<llo_original>
// kernel: tpu_custom_call.1
$region0: #{tpu_custom_call.1}
  #allocation0 [shape = 'u32[]', space=smem, size = 0x4, offset = 0x4, fixed_abs, tag = 'smem constant byte address 0x4 - core index']
  #allocation1 [shape = 'u32[144,128]{1,0:T(1,128)}', space=vmem, size = 0x12000, scoped, tag = 'internal scratch']
  %s0 = inlined_call_operand.hbm [shape: f32[8,32], index: 0, kind: input, shape index: {}]
  %s1 = inlined_call_operand.hbm [shape: f32[2,8,32], index: 1, kind: input, shape index: {}]
  %s2 = inlined_call_operand.hbm [shape: f32[2,16,32], index: 2, kind: output, shape index: {}]
  %s3 = sld [smem:[#allocation0]]
  $region26: #{tpu_custom_call.1} parent=0
    _
  %s5 = ssub.s32 1, %s3
  %s6 = scalar_select 0, %s5, %s3
  $region1: #{tpu_custom_call.1} parent=0
    #allocation2 [shape = 'u8[4096]{0}', space=vmem, size = 0x1000, scoped, tag = 'input window, operand 0, single buffered']
    #allocation3 [shape = 's32[1]{0}', space=sflag, size = 0x4, scoped, tag = 'scoped memory for tpu_custom_call.1']
    #allocation4 [shape = 's32[1]{0}', space=sflag, size = 0x4, scoped, tag = 'scoped memory for tpu_custom_call.1']
    #allocation5 [shape = 'u8[8192]{0}', space=vmem, size = 0x2000, scoped, tag = 'input window, operand 1, single buffered']
    #allocation6 [shape = 's32[1]{0}', space=sflag, size = 0x4, scoped, tag = 'scoped memory for tpu_custom_call.1']
    #allocation7 [shape = 'u8[16384]{0}', space=vmem, size = 0x4000, scoped, tag = 'output window, operand 0, single buffered']
    %7 = vsyncpa [#allocation3], 0
    %8 = vsyncpa [#allocation6], 0
    %9 = vsyncpa [#allocation4], 0
    // Predicated region
    $region2: #{tpu_custom_call.1} parent=1 // pred_check
      _
    $region3: #{tpu_custom_call.1} parent=1 // pred_check_branch
      %11 = sbr.rel (0) target = $region5
    $region4: #{tpu_custom_call.1} parent=1 // pred_region
      %s13 = ssub.s32 128, 128
      %14 = vsyncadd [#allocation3], %s13
      %s16 = sshll.u32 [#allocation2], 4
      %s17 = int_to_ptr.vmem [resolvable:$true] %s16
      %19 = dma.hbm_to_vmem [thread:$0]  %s0, 128, %s17, [#allocation3]
    $region5: #{tpu_custom_call.1} parent=1 // pred_fallthru
      _
    // Predicated region
    $region6: #{tpu_custom_call.1} parent=1 // pred_check
      _
    $region7: #{tpu_custom_call.1} parent=1 // pred_check_branch
      %21 = sbr.rel (0) target = $region9
    $region8: #{tpu_custom_call.1} parent=1 // pred_region
      %s23 = ssub.s32 256, 256
      %24 = vsyncadd [#allocation6], %s23
      %s25 = sshll.u32 [#allocation5], 4
      %s26 = int_to_ptr.vmem [resolvable:$true] %s25
      %31 = dma.hbm_to_vmem [thread:$0]  %s1, 256, %s26, [#allocation6], 128, 128, 8
    $region9: #{tpu_custom_call.1} parent=1 // pred_fallthru
      _
    // Predicated region
    $region10: #{tpu_custom_call.1} parent=1 // pred_check
      _
    $region11: #{tpu_custom_call.1} parent=1 // pred_check_branch
      %33 = sbr.rel (0) target = $region13
    $region12: #{tpu_custom_call.1} parent=1 // pred_region
      %34 = dma.done [#allocation3], 128
    $region13: #{tpu_custom_call.1} parent=1 // pred_fallthru
      _
    // Predicated region
    $region14: #{tpu_custom_call.1} parent=1 // pred_check
      _
    $region15: #{tpu_custom_call.1} parent=1 // pred_check_branch
      %36 = sbr.rel (0) target = $region17
    $region16: #{tpu_custom_call.1} parent=1 // pred_region
      %37 = dma.done [#allocation6], 256
    $region17: #{tpu_custom_call.1} parent=1 // pred_fallthru
      _
    %v38 = vld [vmem:[#allocation2] sm:$0xff]
    %vm39 = vcmask 261120
    %40 = vst.msk [vmem:[#allocation7] sm:$0xff] %vm39, %v38
    %41 = vst.msk [vmem:[#allocation7 + $0x10] sm:$0xff] %vm39, %v38
    %v42 = vld [vmem:[#allocation5] sm:$0xff]
    %v43 = vld [vmem:[#allocation5 + $0x8] sm:$0xff]
    %44 = vst.msk [vmem:[#allocation7 + $0x8] sm:$0xff] %vm39, %v42
    %45 = vst.msk [vmem:[#allocation7 + $0x18] sm:$0xff] %vm39, %v43
    // Predicated region
    $region18: #{tpu_custom_call.1} parent=1 // pred_check
      _
    $region19: #{tpu_custom_call.1} parent=1 // pred_check_branch
      %47 = sbr.rel (0) target = $region21
    $region20: #{tpu_custom_call.1} parent=1 // pred_region
      %s49 = ssub.s32 512, 512
      %50 = vsyncadd [#allocation4], %s49
      %s51 = sshll.u32 [#allocation7], 4
      %s52 = int_to_ptr.vmem [resolvable:$true] %s51
      %57 = dma.vmem_to_hbm [thread:$0]  %s52, 512, %s2, [#allocation4], 128, 128, 8
    $region21: #{tpu_custom_call.1} parent=1 // pred_fallthru
      _
    // Predicated region
    $region22: #{tpu_custom_call.1} parent=1 // pred_check
      _
    $region23: #{tpu_custom_call.1} parent=1 // pred_check_branch
      %59 = sbr.rel (0) target = $region25
    $region24: #{tpu_custom_call.1} parent=1 // pred_region
      %60 = dma.done [#allocation4], 512
    $region25: #{tpu_custom_call.1} parent=1 // pred_fallthru
      _
    %61 = vsyncpa [#allocation3], 1
    %62 = vsyncpa [#allocation6], 1
    %63 = vsyncpa [#allocation4], 1

</llo_original>
